<compile_context>
chip_gen: v5e
topology: v5e:2x2
jax: 0.10.0
libtpu: 0.0.40
codegen_flags: <defaults>
</compile_context>

<pallas_src>
import jax
import jax.numpy as jnp
from jax.experimental import pallas as pl
from jax.experimental.pallas import tpu as pltpu


def _attention_lbsa_kernel(x_ref, w_ref, b_ref, ctx_ref, mask_ref,
                           out_ref, a_ref):
    Bb, T, F = x_ref.shape

    x = x_ref[...]                                  # (Bb, T, F), native dtype
    w = w_ref[...]                                  # (F, F),     native dtype
    b = b_ref[...].astype(jnp.float32)              # (1, F)
    ctx = ctx_ref[...].astype(jnp.float32)          # (1, F) context row-vector
    m = mask_ref[...]                               # (Bb, T) float, 1.0 = keep

    # eij = tanh(x @ W + b) over all Bb*T rows in a single MXU pass
    # (f32 accumulation via preferred_element_type).
    x2 = x.reshape(Bb * T, F)
    eij = jnp.dot(x2, w, preferred_element_type=jnp.float32) + b    # (Bb*T, F)
    eij = jnp.tanh(eij)

    # scores = eij @ context_vector, done as VPU mul + cross-lane reduce.
    # (An N=1 MXU matmul would waste the whole MXU output width.)
    eij3 = eij.reshape(Bb, T, F)
    scores = jnp.sum(eij3 * ctx.reshape(1, 1, F), axis=-1)          # (Bb, T)
    # NOTE: fully-masked rows produce NaN (softmax over all -inf), matching
    # the PyTorch original.
    scores = jnp.where(m > 0.0, scores, -jnp.inf)

    # softmax over the step dimension (lane axis)
    smax = jnp.max(scores, axis=-1, keepdims=True)                  # (Bb, 1)
    p = jnp.exp(scores - smax)                                      # (Bb, T)
    denom = jnp.sum(p, axis=-1, keepdims=True)                      # (Bb, 1)
    a = p * pl.reciprocal(denom, approx=True)                       # (Bb, T)

    a_ref[...] = a.astype(a_ref.dtype)

    # weighted_input = x * a ; sum over the step axis -> (Bb, F)
    weighted = x.astype(jnp.float32) * a[:, :, None]                # (Bb, T, F)
    out_ref[...] = jnp.sum(weighted, axis=1).astype(out_ref.dtype)


def _round_up(n, m):
    return ((n + m - 1) // m) * m


def attention_lbsa(x, weight, bias, context, mask, *, block_b=None):
    """Pallas implementation of Attention_LBSA.forward.

    x:       (B, T, F)
    weight:  (F, F)
    bias:    (F,)
    context: (F, 1)
    mask:    (B, T) bool
    returns: (sum over steps (B, F) in x.dtype, attention weights (B, T) f32)
    """
    B, T, F = x.shape

    if block_b is None:
        # Target ~256 MXU rows (Bb*T) per grid step (fills v6e/v7x MXU,
        # >=128 fills v5e), but never pad a tiny batch past the next multiple
        # of 8 (keeps 2-D output blocks (8,128)-legal when the grid is > 1).
        block_b = min(_round_up(B, 8), _round_up(pl.cdiv(256, T), 8))
    num_blocks = pl.cdiv(B, block_b)
    Bp = num_blocks * block_b

    mask_f = mask.astype(jnp.float32)
    if Bp != B:
        pad = Bp - B
        x = jnp.concatenate([x, jnp.zeros((pad, T, F), x.dtype)], axis=0)
        # Padded rows: all-valid mask over zero inputs -> finite (uniform)
        # softmax, no NaNs; the rows are sliced off before returning.
        mask_f = jnp.concatenate([mask_f, jnp.ones((pad, T), jnp.float32)],
                                 axis=0)

    bias_row = bias.reshape(1, F)
    ctx_row = context.reshape(1, F)     # (F,1) -> lane-dense row vector

    out_sum, a = pl.pallas_call(
        _attention_lbsa_kernel,
        out_shape=(
            jax.ShapeDtypeStruct((Bp, F), x.dtype),
            jax.ShapeDtypeStruct((Bp, T), jnp.float32),
        ),
        grid_spec=pltpu.PrefetchScalarGridSpec(
            num_scalar_prefetch=0,
            grid=(num_blocks,),
            in_specs=[
                pl.BlockSpec((block_b, T, F), lambda i: (i, 0, 0)),  # x rows
                pl.BlockSpec((F, F), lambda i: (0, 0)),              # weight
                pl.BlockSpec((1, F), lambda i: (0, 0)),              # bias
                pl.BlockSpec((1, F), lambda i: (0, 0)),              # context
                pl.BlockSpec((block_b, T), lambda i: (i, 0)),        # mask
            ],
            out_specs=[
                pl.BlockSpec((block_b, F), lambda i: (i, 0)),        # sum
                pl.BlockSpec((block_b, T), lambda i: (i, 0)),        # attn
            ],
        ),
        compiler_params=pltpu.CompilerParams(
            dimension_semantics=("parallel",)),
        # TODO(synk): for very large F (>= ~2048 f32) on v7x (64 MiB VMEM),
        # tile the weight along K and set vmem_limit_bytes explicitly.
    )(x, weight, bias_row, ctx_row, mask_f)

    return out_sum[:B], a[:B]


def _xavier_uniform(key, shape):
    fan_in, fan_out = shape[0], shape[1]
    bound = (6.0 / (fan_in + fan_out)) ** 0.5
    return jax.random.uniform(key, shape, jnp.float32, -bound, bound)


if __name__ == "__main__":
    B, T, F = 2, 8, 32  # batch, step_dim, feature_dim

    key = jax.random.PRNGKey(0)
    kx, kw, kc = jax.random.split(key, 3)

    x = jax.random.normal(kx, (B, T, F), jnp.float32)
    weight = _xavier_uniform(kw, (F, F))                 # nn.init.xavier_uniform_
    context = _xavier_uniform(kc, (F, 1))                # nn.init.xavier_uniform_
    bias = jnp.zeros((F,), jnp.float32)                  # bias starts at zero
    # mask: first row fully valid, second row only first 5 steps valid
    mask = jnp.array([[True] * T,
                      [True] * 5 + [False] * (T - 5)], dtype=bool)

    out_sum, attn = attention_lbsa(x, weight, bias, context, mask)
    out_sum, attn = jax.block_until_ready((out_sum, attn))

    # pure-JAX reference for sanity
    eij = jnp.tanh(x.reshape(-1, F) @ weight + bias) @ context
    eij = eij.reshape(B, T)
    eij = jnp.where(mask, eij, -jnp.inf)
    a_ref = jax.nn.softmax(eij, axis=1)
    ref_sum = jnp.sum(x * a_ref[..., None], axis=1)

    # approx reciprocal in-kernel -> slightly looser tolerance than exact div
    assert jnp.allclose(attn, a_ref, atol=5e-3, rtol=5e-3), "attention mismatch"
    assert jnp.allclose(out_sum, ref_sum, atol=5e-3, rtol=5e-3), "sum mismatch"

    print("KERNEL_OK")
</pallas_src>

<mosaic_0001>
module attributes {stable_mosaic.version = 11 : i64} {
  func.func @_attention_lbsa_kernel(%arg0: i32, %arg1: memref<8x8x32xf32, #tpu.memory_space<vmem>>, %arg2: memref<32x32xf32, #tpu.memory_space<vmem>>, %arg3: memref<1x32xf32, #tpu.memory_space<vmem>>, %arg4: memref<1x32xf32, #tpu.memory_space<vmem>>, %arg5: memref<8x8xf32, #tpu.memory_space<vmem>>, %arg6: memref<8x32xf32, #tpu.memory_space<vmem>>, %arg7: memref<8x8xf32, #tpu.memory_space<vmem>>) attributes {dimension_semantics = [#tpu.dimension_semantics<parallel>], iteration_bounds = array<i64: 1>, scalar_prefetch = 0 : i64, scratch_operands = 0 : i64, tpu.core_type = #tpu.core_type<tc>, window_params = [{transform_indices = @transform_0, window_bounds = array<i64: 8, 8, 32>}, {pipeline_mode = #tpu.pipeline_mode<synchronous>, transform_indices = @transform_1, window_bounds = array<i64: 32, 32>}, {pipeline_mode = #tpu.pipeline_mode<synchronous>, transform_indices = @transform_2, window_bounds = array<i64: 1, 32>}, {pipeline_mode = #tpu.pipeline_mode<synchronous>, transform_indices = @transform_3, window_bounds = array<i64: 1, 32>}, {transform_indices = @transform_4, window_bounds = array<i64: 8, 8>}, {transform_indices = @transform_5, window_bounds = array<i64: 8, 32>}, {transform_indices = @transform_6, window_bounds = array<i64: 8, 8>}]} {
    %c0 = arith.constant 0 : index
    %c0_0 = arith.constant 0 : index
    %c0_1 = arith.constant 0 : index
    %0 = vector.load %arg1[%c0, %c0_0, %c0_1] : memref<8x8x32xf32, #tpu.memory_space<vmem>>, vector<8x8x32xf32>
    %c0_2 = arith.constant 0 : index
    %c0_3 = arith.constant 0 : index
    %1 = vector.load %arg2[%c0_2, %c0_3] : memref<32x32xf32, #tpu.memory_space<vmem>>, vector<32x32xf32>
    %c0_4 = arith.constant 0 : index
    %c0_5 = arith.constant 0 : index
    %2 = vector.load %arg3[%c0_4, %c0_5] : memref<1x32xf32, #tpu.memory_space<vmem>>, vector<1x32xf32>
    %c0_6 = arith.constant 0 : index
    %c0_7 = arith.constant 0 : index
    %3 = vector.load %arg4[%c0_6, %c0_7] : memref<1x32xf32, #tpu.memory_space<vmem>>, vector<1x32xf32>
    %c0_8 = arith.constant 0 : index
    %c0_9 = arith.constant 0 : index
    %4 = vector.load %arg5[%c0_8, %c0_9] : memref<8x8xf32, #tpu.memory_space<vmem>>, vector<8x8xf32>
    %5 = vector.shape_cast %0 : vector<8x8x32xf32> to vector<64x32xf32>
    %cst = arith.constant dense<0.000000e+00> : vector<64x32xf32>
    %6 = tpu.matmul %5, %1, %cst {dimension_numbers = #tpu.dot_dimension_numbers<[1], [0], [0], [1], [0, 0, 1, 1], [], []>} : vector<64x32xf32>, vector<32x32xf32>, vector<64x32xf32> -> vector<64x32xf32>
    %7 = vector.broadcast %2 : vector<1x32xf32> to vector<64x32xf32>
    %8 = arith.addf %6, %7 : vector<64x32xf32>
    %9 = math.tanh %8 : vector<64x32xf32>
    %10 = vector.shape_cast %9 : vector<64x32xf32> to vector<8x8x32xf32>
    %11 = vector.shape_cast %3 : vector<1x32xf32> to vector<1x1x32xf32>
    %12 = vector.broadcast %11 : vector<1x1x32xf32> to vector<8x8x32xf32>
    %13 = arith.mulf %10, %12 : vector<8x8x32xf32>
    %cst_10 = arith.constant dense<0.000000e+00> : vector<8x8xf32>
    %14 = vector.multi_reduction <add>, %13, %cst_10 [2] : vector<8x8x32xf32> to vector<8x8xf32>
    %cst_11 = arith.constant 0.000000e+00 : f32
    %15 = vector.broadcast %cst_11 : f32 to vector<8x8xf32>
    %16 = arith.cmpf ogt, %4, %15 : vector<8x8xf32>
    %cst_12 = arith.constant 0xFF800000 : f32
    %17 = vector.broadcast %cst_12 : f32 to vector<8x8xf32>
    %18 = arith.select %16, %14, %17 : vector<8x8xi1>, vector<8x8xf32>
    %cst_13 = arith.constant dense<0xFF800000> : vector<8xf32>
    %19 = vector.multi_reduction <maximumf>, %18, %cst_13 [1] : vector<8x8xf32> to vector<8xf32>
    %20 = vector.shape_cast %19 : vector<8xf32> to vector<8x1xf32>
    %21 = vector.broadcast %20 : vector<8x1xf32> to vector<8x8xf32>
    %22 = arith.subf %18, %21 : vector<8x8xf32>
    %23 = math.exp %22 : vector<8x8xf32>
    %cst_14 = arith.constant dense<0.000000e+00> : vector<8xf32>
    %24 = vector.multi_reduction <add>, %23, %cst_14 [1] : vector<8x8xf32> to vector<8xf32>
    %25 = vector.shape_cast %24 : vector<8xf32> to vector<8x1xf32>
    %26 = tpu.reciprocal %25 {approx = true} : vector<8x1xf32> -> vector<8x1xf32>
    %27 = vector.broadcast %26 : vector<8x1xf32> to vector<8x8xf32>
    %28 = arith.mulf %23, %27 : vector<8x8xf32>
    %c0_15 = arith.constant 0 : index
    %c0_16 = arith.constant 0 : index
    %29 = vector.load %arg7[%c0_15, %c0_16] : memref<8x8xf32, #tpu.memory_space<vmem>>, vector<8x8xf32>
    tpu.vector_store %arg7[%c0_15, %c0_16], %28 {strides = array<i32>} : memref<8x8xf32, #tpu.memory_space<vmem>>, vector<8x8xf32>,
    %30 = vector.shape_cast %28 : vector<8x8xf32> to vector<8x8x1xf32>
    %31 = vector.broadcast %30 : vector<8x8x1xf32> to vector<8x8x32xf32>
    %32 = arith.mulf %0, %31 : vector<8x8x32xf32>
    %cst_17 = arith.constant dense<0.000000e+00> : vector<8x32xf32>
    %33 = vector.multi_reduction <add>, %32, %cst_17 [1] : vector<8x8x32xf32> to vector<8x32xf32>
    %c0_18 = arith.constant 0 : index
    %c0_19 = arith.constant 0 : index
    %34 = vector.load %arg6[%c0_18, %c0_19] : memref<8x32xf32, #tpu.memory_space<vmem>>, vector<8x32xf32>
    tpu.vector_store %arg6[%c0_18, %c0_19], %33 {strides = array<i32>} : memref<8x32xf32, #tpu.memory_space<vmem>>, vector<8x32xf32>,
    return
  }
  func.func @transform_0(%arg0: i32) -> (i32, i32, i32) {
    %c0_i32 = arith.constant 0 : i32
    %c0_i32_0 = arith.constant 0 : i32
    %c0_i32_1 = arith.constant 0 : i32
    return %arg0, %c0_i32, %c0_i32_0 : i32, i32, i32
  }
  func.func @transform_1(%arg0: i32) -> (i32, i32) {
    %c0_i32 = arith.constant 0 : i32
    %c0_i32_0 = arith.constant 0 : i32
    %c0_i32_1 = arith.constant 0 : i32
    return %c0_i32, %c0_i32_0 : i32, i32
  }
  func.func @transform_2(%arg0: i32) -> (i32, i32) {
    %c0_i32 = arith.constant 0 : i32
    %c0_i32_0 = arith.constant 0 : i32
    %c0_i32_1 = arith.constant 0 : i32
    return %c0_i32, %c0_i32_0 : i32, i32
  }
  func.func @transform_3(%arg0: i32) -> (i32, i32) {
    %c0_i32 = arith.constant 0 : i32
    %c0_i32_0 = arith.constant 0 : i32
    %c0_i32_1 = arith.constant 0 : i32
    return %c0_i32, %c0_i32_0 : i32, i32
  }
  func.func @transform_4(%arg0: i32) -> (i32, i32) {
    %c0_i32 = arith.constant 0 : i32
    %c0_i32_0 = arith.constant 0 : i32
    return %arg0, %c0_i32 : i32, i32
  }
  func.func @transform_5(%arg0: i32) -> (i32, i32) {
    %c0_i32 = arith.constant 0 : i32
    %c0_i32_0 = arith.constant 0 : i32
    return %arg0, %c0_i32 : i32, i32
  }
  func.func @transform_6(%arg0: i32) -> (i32, i32) {
    %c0_i32 = arith.constant 0 : i32
    %c0_i32_0 = arith.constant 0 : i32
    return %arg0, %c0_i32 : i32, i32
  }
}

</mosaic_0001>

<llo_original>
// kernel: tpu_custom_call.1
$region0: #{tpu_custom_call.1}
  #allocation0 [shape = 'u32[]', space=smem, size = 0x4, offset = 0x4, fixed_abs, tag = 'smem constant byte address 0x4 - core index']
  #allocation1 [shape = 'u32[72,128]{1,0:T(1,128)}', space=vmem, size = 0x9000, scoped, tag = 'internal scratch']
  %s0 = inlined_call_operand.hbm [shape: f32[8,8,32], index: 0, kind: input, shape index: {}]
  %s1 = inlined_call_operand.hbm [shape: f32[32,32], index: 1, kind: input, shape index: {}]
  %s2 = inlined_call_operand.vmem [shape: f32[1,32], index: 2, kind: input, shape index: {}]
  %s3 = inlined_call_operand.vmem [shape: f32[1,32], index: 3, kind: input, shape index: {}]
  %s4 = inlined_call_operand.hbm [shape: f32[8,8], index: 4, kind: input, shape index: {}]
  %s5 = inlined_call_operand.hbm [shape: f32[8,32], index: 5, kind: output, shape index: {0}]
  %s6 = inlined_call_operand.hbm [shape: f32[8,8], index: 6, kind: output, shape index: {1}]
  %7 = xla_tuple %s5, %s6
  %s8 = sld [smem:[#allocation0]]
  $region50: #{tpu_custom_call.1} parent=0
    _
  %s10 = ssub.s32 1, %s8
  %s11 = scalar_select 0, %s10, %s8
  $region1: #{tpu_custom_call.1} parent=0
    #allocation2 [shape = 'u8[32768]{0}', space=vmem, size = 0x8000, scoped, tag = 'input window, operand 0, single buffered']
    #allocation3 [shape = 's32[1]{0}', space=sflag, size = 0x4, scoped, tag = 'scoped memory for tpu_custom_call.1']
    #allocation4 [shape = 's32[1]{0}', space=sflag, size = 0x4, scoped, tag = 'scoped memory for tpu_custom_call.1']
    #allocation5 [shape = 'u8[16384]{0}', space=vmem, size = 0x4000, scoped, tag = 'input window, operand 1, single buffered']
    #allocation6 [shape = 's32[1]{0}', space=sflag, size = 0x4, scoped, tag = 'scoped memory for tpu_custom_call.1']
    #allocation7 [shape = 'u8[4096]{0}', space=vmem, size = 0x1000, scoped, tag = 'input window, operand 4, single buffered']
    #allocation8 [shape = 'u8[4096]{0}', space=vmem, size = 0x1000, scoped, tag = 'output window, operand 0, single buffered']
    #allocation9 [shape = 'u8[4096]{0}', space=vmem, size = 0x1000, scoped, tag = 'output window, operand 1, single buffered']
    #allocation10 [shape = 's32[1]{0}', space=sflag, size = 0x4, scoped, tag = 'scoped memory for tpu_custom_call.1']
    %12 = vsyncpa [#allocation3], 0
    %13 = vsyncpa [#allocation6], 0
    %14 = vsyncpa [#allocation4], 0
    %15 = vsyncpa [#allocation10], 0
    // Predicated region
    $region2: #{tpu_custom_call.1} parent=1 // pred_check
      _
    $region3: #{tpu_custom_call.1} parent=1 // pred_check_branch
      %17 = sbr.rel (0) target = $region5
    $region4: #{tpu_custom_call.1} parent=1 // pred_region
      %19 = vsyncadd [#allocation3], 0
      %s20 = sshll.u32 %s0, 4
      %s21 = int_to_ptr.hbm [resolvable:$true] %s20
      %s22 = sshll.u32 [#allocation2], 4
      %s23 = int_to_ptr.vmem [resolvable:$true] %s22
      %28 = dma.hbm_to_vmem [thread:$0]  %s21, 1024, %s23, [#allocation3], 128, 128, 8
    $region5: #{tpu_custom_call.1} parent=1 // pred_fallthru
      _
    // Predicated region
    $region6: #{tpu_custom_call.1} parent=1 // pred_check
      _
    $region7: #{tpu_custom_call.1} parent=1 // pred_check_branch
      %30 = sbr.rel (0) target = $region9
    $region8: #{tpu_custom_call.1} parent=1 // pred_region
      %32 = vsyncadd [#allocation6], 0
      %s33 = sshll.u32 %s1, 4
      %s34 = int_to_ptr.hbm [resolvable:$true] %s33
      %s35 = sshll.u32 [#allocation5], 4
      %s36 = int_to_ptr.vmem [resolvable:$true] %s35
      %41 = dma.hbm_to_vmem [thread:$0]  %s34, 512, %s36, [#allocation6], 128, 128, 8
    $region9: #{tpu_custom_call.1} parent=1 // pred_fallthru
      _
    // Predicated region
    $region10: #{tpu_custom_call.1} parent=1 // pred_check
      _
    $region11: #{tpu_custom_call.1} parent=1 // pred_check_branch
      %43 = sbr.rel (0) target = $region13
    $region12: #{tpu_custom_call.1} parent=1 // pred_region
      _
    $region13: #{tpu_custom_call.1} parent=1 // pred_fallthru
      _
    // Predicated region
    $region14: #{tpu_custom_call.1} parent=1 // pred_check
      _
    $region15: #{tpu_custom_call.1} parent=1 // pred_check_branch
      %45 = sbr.rel (0) target = $region17
    $region16: #{tpu_custom_call.1} parent=1 // pred_region
      _
    $region17: #{tpu_custom_call.1} parent=1 // pred_fallthru
      _
    // Predicated region
    $region18: #{tpu_custom_call.1} parent=1 // pred_check
      _
    $region19: #{tpu_custom_call.1} parent=1 // pred_check_branch
      %47 = sbr.rel (0) target = $region21
    $region20: #{tpu_custom_call.1} parent=1 // pred_region
      %49 = vsyncadd [#allocation6], 0
      %s51 = sshll.u32 %s4, 4
      %s52 = int_to_ptr.hbm [resolvable:$true] %s51
      %s53 = sshll.u32 [#allocation7], 4
      %s54 = int_to_ptr.vmem [resolvable:$true] %s53
      %56 = dma.hbm_to_vmem [thread:$0]  %s52, 128, %s54, [#allocation6]
    $region21: #{tpu_custom_call.1} parent=1 // pred_fallthru
      _
    // Predicated region
    $region22: #{tpu_custom_call.1} parent=1 // pred_check
      _
    $region23: #{tpu_custom_call.1} parent=1 // pred_check_branch
      %58 = sbr.rel (0) target = $region25
    $region24: #{tpu_custom_call.1} parent=1 // pred_region
      %60 = dma.done [#allocation3], 1024
    $region25: #{tpu_custom_call.1} parent=1 // pred_fallthru
      _
    // Predicated region
    $region26: #{tpu_custom_call.1} parent=1 // pred_check
      _
    $region27: #{tpu_custom_call.1} parent=1 // pred_check_branch
      %62 = sbr.rel (0) target = $region29
    $region28: #{tpu_custom_call.1} parent=1 // pred_region
      %64 = dma.done [#allocation6], 512
    $region29: #{tpu_custom_call.1} parent=1 // pred_fallthru
      _
    // Predicated region
    $region30: #{tpu_custom_call.1} parent=1 // pred_check
      _
    $region31: #{tpu_custom_call.1} parent=1 // pred_check_branch
      %66 = sbr.rel (0) target = $region33
    $region32: #{tpu_custom_call.1} parent=1 // pred_region
      %68 = dma.done [#allocation6], 128
    $region33: #{tpu_custom_call.1} parent=1 // pred_fallthru
      _
    %v69 = vld [vmem:[#allocation2] sm:$0xff]
    %v70 = vld [vmem:[#allocation2 + $0x8] sm:$0xff]
    %v71 = vld [vmem:[#allocation2 + $0x10] sm:$0xff]
    %v72 = vld [vmem:[#allocation2 + $0x18] sm:$0xff]
    %v73 = vld [vmem:[#allocation2 + $0x20] sm:$0xff]
    %v74 = vld [vmem:[#allocation2 + $0x28] sm:$0xff]
    %v75 = vld [vmem:[#allocation2 + $0x30] sm:$0xff]
    %v76 = vld [vmem:[#allocation2 + $0x38] sm:$0xff]
    %v77 = vld [vmem:[#allocation5] sm:$0xff]
    %v78 = vld [vmem:[#allocation5 + $0x8] sm:$0xff]
    %v79 = vld [vmem:[#allocation5 + $0x10] sm:$0xff]
    %v80 = vld [vmem:[#allocation5 + $0x18] sm:$0xff]
    %v81 = vld [vmem:[%s2] sm:$0x1]
    %v82 = vld [vmem:[%s3] sm:$0x1]
    %v83 = vld [vmem:[#allocation7] sm:$0xff]
    %v85 = vperm.slane %v81, 0
    %vm87 = vcmask 261120
    %v89 = vsel %vm87, %v69, 0
    %v92 = vsel %vm87, %v70, 0
    %v95 = vsel %vm87, %v71, 0
    %v98 = vsel %vm87, %v72, 0
    %v101 = vsel %vm87, %v73, 0
    %v104 = vsel %vm87, %v74, 0
    %v107 = vsel %vm87, %v75, 0
    %v110 = vsel %vm87, %v76, 0
    %112 = vmatpush.msra.mxu0 0.0
    %113 = vmatpush.msra.mxu0 0.0
    %114 = vmatpush.msra.mxu0 0.0
    %115 = vmatpush.msra.mxu0 0.0
    %116 = vmatpush.msra.mxu0 0.0
    %117 = vmatpush.msra.mxu0 0.0
    %118 = vmatpush.msra.mxu0 0.0
    %119 = vmatpush.msra.mxu0 0.0
    %120 = vmatpush.msra.mxu0 0.0
    %121 = vmatpush.msra.mxu0 0.0
    %122 = vmatpush.msra.mxu0 0.0
    %123 = vmatpush.msra.mxu0 0.0
    %124 = vmatpush.msra.mxu0 %v80
    %125 = vmatpush.msra.mxu0 %v79
    %126 = vmatpush.msra.mxu0 %v78
    %127 = vmatpush.msra.mxu0 %v77
    %128 = vmatmul.f32.gmra.mxu0 %v89
    %v129 = vpop.f32.mrf.mxu0
    %v130 = vadd.f32 %v85, %v129
    %131 = vmatmul.f32.gmra.mxu0 %v92
    %v132 = vpop.f32.mrf.mxu0
    %v133 = vadd.f32 %v85, %v132
    %134 = vmatmul.f32.gmra.mxu0 %v95
    %v135 = vpop.f32.mrf.mxu0
    %v136 = vadd.f32 %v85, %v135
    %137 = vmatmul.f32.gmra.mxu0 %v98
    %v138 = vpop.f32.mrf.mxu0
    %v139 = vadd.f32 %v85, %v138
    %140 = vmatmul.f32.gmra.mxu0 %v101
    %v141 = vpop.f32.mrf.mxu0
    %v142 = vadd.f32 %v85, %v141
    %143 = vmatmul.f32.gmra.mxu0 %v104
    %v144 = vpop.f32.mrf.mxu0
    %v145 = vadd.f32 %v85, %v144
    %146 = vmatmul.f32.gmra.mxu0 %v107
    %v147 = vpop.f32.mrf.mxu0
    %v148 = vadd.f32 %v85, %v147
    %149 = vmatmul.f32.gmra.mxu0 %v110
    %v150 = vpop.f32.mrf.mxu0
    %v151 = vadd.f32 %v85, %v150
    %152 = vdwg.mxu0
    %v153 = vtanh.pop %v130
    %v154 = vtanh.pop %v133
    %v155 = vtanh.pop %v136
    %v156 = vtanh.pop %v139
    %v157 = vtanh.pop %v142
    %v158 = vtanh.pop %v145
    %v159 = vtanh.pop %v148
    %v160 = vtanh.pop %v151
    %v162 = vperm.slane %v82, 0
    %v164 = vmul.f32 %v153, %v162
    %v165 = vmul.f32 %v154, %v162
    %v166 = vmul.f32 %v155, %v162
    %v167 = vmul.f32 %v156, %v162
    %v168 = vmul.f32 %v157, %v162
    %v169 = vmul.f32 %v158, %v162
    %v170 = vmul.f32 %v159, %v162
    %v171 = vmul.f32 %v160, %v162
    %v172 = vsel %vm87, %v164, 0.0
    %173 = vadd.xlane.f32.xlu0 %v172
    %v174 = vpop.xlane.xlu0 %173
    %v175 = vsel %vm87, %v165, 0.0
    %176 = vadd.xlane.f32.xlu0 %v175
    %v177 = vpop.xlane.xlu0 %176
    %v178 = vsel %vm87, %v166, 0.0
    %179 = vadd.xlane.f32.xlu0 %v178
    %v180 = vpop.xlane.xlu0 %179
    %v181 = vsel %vm87, %v167, 0.0
    %182 = vadd.xlane.f32.xlu0 %v181
    %v183 = vpop.xlane.xlu0 %182
    %v184 = vsel %vm87, %v168, 0.0
    %185 = vadd.xlane.f32.xlu0 %v184
    %v186 = vpop.xlane.xlu0 %185
    %v187 = vsel %vm87, %v169, 0.0
    %188 = vadd.xlane.f32.xlu0 %v187
    %v189 = vpop.xlane.xlu0 %188
    %v190 = vsel %vm87, %v170, 0.0
    %191 = vadd.xlane.f32.xlu0 %v190
    %v192 = vpop.xlane.xlu0 %191
    %v193 = vsel %vm87, %v171, 0.0
    %194 = vadd.xlane.f32.xlu0 %v193
    %v195 = vpop.xlane.xlu0 %194
    %vm196 = vcmp.gt.f32.partialorder %v83, 0.0
    %v205 = vlaneseq
    %v206 = vand.u32 %v205, 127
    %v207 = vperm.slane %v174, %v206
    %v208 = vperm.slane %v177, %v206
    %v209 = vperm.slane %v180, %v206
    %v210 = vperm.slane %v183, %v206
    %v211 = vperm.slane %v186, %v206
    %v212 = vperm.slane %v189, %v206
    %v213 = vperm.slane %v192, %v206
    %v214 = vperm.slane %v195, %v206
    %vm215 = vcmask 1041409
    %v216 = vsel %vm215, %v208, %v207
    %vm217 = vcmask 1042434
    %v218 = vsel %vm217, %v209, %v216
    %vm219 = vcmask 1043459
    %v220 = vsel %vm219, %v210, %v218
    %vm221 = vcmask 1044484
    %v222 = vsel %vm221, %v211, %v220
    %vm223 = vcmask 1045509
    %v224 = vsel %vm223, %v212, %v222
    %vm225 = vcmask 1046534
    %v226 = vsel %vm225, %v213, %v224
    %vm227 = vcmask 1047559
    %v228 = vsel %vm227, %v214, %v226
    %v230 = vsel %vm196, %v228, -inf
    %vm231 = vcmask 64512
    %v232 = vsel %vm231, %v230, -inf
    %233 = vmax.xlane.f32.xlu0 %v232
    %v234 = vpop.xlane.xlu0 %233
    %v235 = vsub.f32 %v230, %v234
    %v236 = vmul.f32 %v235, 1.442695
    %v237 = vpow.pop %v236
    %v238 = vsel %vm231, %v237, 0.0
    %239 = vadd.xlane.f32.xlu0 %v238
    %v240 = vpop.xlane.xlu0 %239
    %v241 = vrcp.pop %v240
    %v242 = vmul.f32 %v237, %v241
    %243 = vst.msk [vmem:[#allocation9] sm:$0xff] %vm231, %v242
    %v244 = vperm.slane %v242, 0
    %v245 = vlaneseq
    %v246 = vshrl.u32 %v245, 7
    %248 = vset.pattern.permute.xlu0 %v246
    %249 = vperm.xlu0 %248, %v244
    %v250 = vpop.permute.xlu0 %249
    %v251 = vperm.slane %v242, 1
    %v252 = vlaneseq
    %v253 = vshrl.u32 %v252, 7
    %255 = vset.pattern.permute.xlu0 %v253
    %256 = vperm.xlu0 %255, %v251
    %v257 = vpop.permute.xlu0 %256
    %v258 = vperm.slane %v242, 2
    %v259 = vlaneseq
    %v260 = vshrl.u32 %v259, 7
    %262 = vset.pattern.permute.xlu0 %v260
    %263 = vperm.xlu0 %262, %v258
    %v264 = vpop.permute.xlu0 %263
    %v265 = vperm.slane %v242, 3
    %v266 = vlaneseq
    %v267 = vshrl.u32 %v266, 7
    %269 = vset.pattern.permute.xlu0 %v267
    %270 = vperm.xlu0 %269, %v265
    %v271 = vpop.permute.xlu0 %270
    %v272 = vperm.slane %v242, 4
    %v273 = vlaneseq
    %v274 = vshrl.u32 %v273, 7
    %276 = vset.pattern.permute.xlu0 %v274
    %277 = vperm.xlu0 %276, %v272
    %v278 = vpop.permute.xlu0 %277
    %v279 = vperm.slane %v242, 5
    %v280 = vlaneseq
    %v281 = vshrl.u32 %v280, 7
    %283 = vset.pattern.permute.xlu0 %v281
    %284 = vperm.xlu0 %283, %v279
    %v285 = vpop.permute.xlu0 %284
    %v286 = vperm.slane %v242, 6
    %v287 = vlaneseq
    %v288 = vshrl.u32 %v287, 7
    %290 = vset.pattern.permute.xlu0 %v288
    %291 = vperm.xlu0 %290, %v286
    %v292 = vpop.permute.xlu0 %291
    %v293 = vperm.slane %v242, 7
    %v294 = vlaneseq
    %v295 = vshrl.u32 %v294, 7
    %297 = vset.pattern.permute.xlu0 %v295
    %298 = vperm.xlu0 %297, %v293
    %v299 = vpop.permute.xlu0 %298
    %v300 = vmul.f32 %v69, %v250
    %v301 = vmul.f32 %v70, %v257
    %v302 = vmul.f32 %v71, %v264
    %v303 = vmul.f32 %v72, %v271
    %v304 = vmul.f32 %v73, %v278
    %v305 = vmul.f32 %v74, %v285
    %v306 = vmul.f32 %v75, %v292
    %v307 = vmul.f32 %v76, %v299
    %v308 = vsel %vm87, %v300, 0.0
    %v309 = vrot.slane %v308, 4
    %v310 = vadd.f32 %v308, %v309
    %v311 = vrot.slane %v310, 2
    %v312 = vadd.f32 %v310, %v311
    %v313 = vrot.slane %v312, 1
    %v314 = vadd.f32 %v312, %v313
    %v315 = vsel %vm87, %v301, 0.0
    %v316 = vrot.slane %v315, 4
    %v317 = vadd.f32 %v315, %v316
    %v318 = vrot.slane %v317, 2
    %v319 = vadd.f32 %v317, %v318
    %v320 = vrot.slane %v319, 1
    %v321 = vadd.f32 %v319, %v320
    %v322 = vsel %vm87, %v302, 0.0
    %v323 = vrot.slane %v322, 4
    %v324 = vadd.f32 %v322, %v323
    %v325 = vrot.slane %v324, 2
    %v326 = vadd.f32 %v324, %v325
    %v327 = vrot.slane %v326, 1
    %v328 = vadd.f32 %v326, %v327
    %v329 = vsel %vm87, %v303, 0.0
    %v330 = vrot.slane %v329, 4
    %v331 = vadd.f32 %v329, %v330
    %v332 = vrot.slane %v331, 2
    %v333 = vadd.f32 %v331, %v332
    %v334 = vrot.slane %v333, 1
    %v335 = vadd.f32 %v333, %v334
    %v336 = vsel %vm87, %v304, 0.0
    %v337 = vrot.slane %v336, 4
    %v338 = vadd.f32 %v336, %v337
    %v339 = vrot.slane %v338, 2
    %v340 = vadd.f32 %v338, %v339
    %v341 = vrot.slane %v340, 1
    %v342 = vadd.f32 %v340, %v341
    %v343 = vsel %vm87, %v305, 0.0
    %v344 = vrot.slane %v343, 4
    %v345 = vadd.f32 %v343, %v344
    %v346 = vrot.slane %v345, 2
    %v347 = vadd.f32 %v345, %v346
    %v348 = vrot.slane %v347, 1
    %v349 = vadd.f32 %v347, %v348
    %v350 = vsel %vm87, %v306, 0.0
    %v351 = vrot.slane %v350, 4
    %v352 = vadd.f32 %v350, %v351
    %v353 = vrot.slane %v352, 2
    %v354 = vadd.f32 %v352, %v353
    %v355 = vrot.slane %v354, 1
    %v356 = vadd.f32 %v354, %v355
    %v357 = vsel %vm87, %v307, 0.0
    %v358 = vrot.slane %v357, 4
    %v359 = vadd.f32 %v357, %v358
    %v360 = vrot.slane %v359, 2
    %v361 = vadd.f32 %v359, %v360
    %v362 = vrot.slane %v361, 1
    %v363 = vadd.f32 %v361, %v362
    %v372 = vsel %vm215, %v321, %v314
    %v373 = vsel %vm217, %v328, %v372
    %v374 = vsel %vm219, %v335, %v373
    %v375 = vsel %vm221, %v342, %v374
    %v376 = vsel %vm223, %v349, %v375
    %v377 = vsel %vm225, %v356, %v376
    %v378 = vsel %vm227, %v363, %v377
    %380 = vst.msk [vmem:[#allocation8] sm:$0xff] %vm87, %v378
    // Predicated region
    $region34: #{tpu_custom_call.1} parent=1 // pred_check
      _
    $region35: #{tpu_custom_call.1} parent=1 // pred_check_branch
      %382 = sbr.rel (0) target = $region37
    $region36: #{tpu_custom_call.1} parent=1 // pred_region
      %384 = vsyncadd [#allocation4], 0
      %s386 = sshll.u32 [#allocation8], 4
      %s387 = int_to_ptr.vmem [resolvable:$true] %s386
      %s388 = sshll.u32 %s5, 4
      %s389 = int_to_ptr.hbm [resolvable:$true] %s388
      %391 = dma.vmem_to_hbm [thread:$0]  %s387, 128, %s389, [#allocation4]
    $region37: #{tpu_custom_call.1} parent=1 // pred_fallthru
      _
    // Predicated region
    $region38: #{tpu_custom_call.1} parent=1 // pred_check
      _
    $region39: #{tpu_custom_call.1} parent=1 // pred_check_branch
      %393 = sbr.rel (0) target = $region41
    $region40: #{tpu_custom_call.1} parent=1 // pred_region
      %395 = vsyncadd [#allocation10], 0
      %s397 = sshll.u32 [#allocation9], 4
      %s398 = int_to_ptr.vmem [resolvable:$true] %s397
      %s399 = sshll.u32 %s6, 4
      %s400 = int_to_ptr.hbm [resolvable:$true] %s399
      %402 = dma.vmem_to_hbm [thread:$0]  %s398, 128, %s400, [#allocation10]
    $region41: #{tpu_custom_call.1} parent=1 // pred_fallthru
      _
    // Predicated region
    $region42: #{tpu_custom_call.1} parent=1 // pred_check
      _
    $region43: #{tpu_custom_call.1} parent=1 // pred_check_branch
      %404 = sbr.rel (0) target = $region45
    $region44: #{tpu_custom_call.1} parent=1 // pred_region
      %406 = dma.done [#allocation4], 128
    $region45: #{tpu_custom_call.1} parent=1 // pred_fallthru
      _
    // Predicated region
    $region46: #{tpu_custom_call.1} parent=1 // pred_check
      _
    $region47: #{tpu_custom_call.1} parent=1 // pred_check_branch
      %408 = sbr.rel (0) target = $region49
    $region48: #{tpu_custom_call.1} parent=1 // pred_region
      %410 = dma.done [#allocation10], 128
    $region49: #{tpu_custom_call.1} parent=1 // pred_fallthru
      _
    %411 = vsyncpa [#allocation3], 1
    %412 = vsyncpa [#allocation6], 1
    %413 = vsyncpa [#allocation4], 1
    %414 = vsyncpa [#allocation10], 1

</llo_original>
